<compile_context>
chip_gen: v5e
topology: v5e:2x2
jax: 0.10.0
libtpu: 0.0.40
codegen_flags: <defaults>
</compile_context>

<pallas_src>
import jax
import jax.numpy as jnp
from jax.experimental import pallas as pl
from jax.experimental.pallas import tpu as pltpu


def residual_linear_kernel(x_ref, w_ref, b_ref, xres_ref, o_ref, acc_ref):
    """acc(i,j) = sum_k x(i,k) @ W(k,j); out(i,j) = acc + b(j) + x(i,j)."""
    k = pl.program_id(2)

    @pl.when(k == 0)
    def _init():
        acc_ref[...] = jnp.zeros_like(acc_ref)

    # MXU matmul, f32 accumulation.
    acc_ref[...] += jnp.dot(
        x_ref[...], w_ref[...], preferred_element_type=jnp.float32
    )

    # Bias + residual exactly once per output tile, off the K hot loop.
    @pl.when(k == pl.num_programs(2) - 1)
    def _finalize():
        out = (
            acc_ref[...]
            + b_ref[...].astype(jnp.float32)
            + xres_ref[...].astype(jnp.float32)
        )
        o_ref[...] = out.astype(o_ref.dtype)


def residual(x, w, b, *, tm=256, tn=512, tk=512):
    """x: (N, H), w: (H, H), b: (1, H). Returns x @ w + b + x."""
    N, H = x.shape
    assert w.shape == (H, H) and b.shape == (1, H)

    # Clamp tiles to the problem size (small shapes run as a single block,
    # which satisfies the (8,128) rule because the block equals the array).
    tm = min(tm, N)
    tn = min(tn, H)
    tk = min(tk, H)
    assert N % tm == 0 and H % tn == 0 and H % tk == 0, (
        "N and H must be divisible by the chosen tile sizes "
        "(pad inputs upstream for ragged shapes)"
    )

    grid = (N // tm, H // tn, H // tk)

    itemsize = jnp.dtype(x.dtype).itemsize
    cost = pl.CostEstimate(
        flops=2 * N * H * H,
        transcendentals=0,
        bytes_accessed=itemsize * (2 * N * H + H * H + H),
    )

    return pl.pallas_call(
        residual_linear_kernel,
        out_shape=jax.ShapeDtypeStruct((N, H), x.dtype),
        grid_spec=pltpu.PrefetchScalarGridSpec(
            num_scalar_prefetch=0,
            grid=grid,
            in_specs=[
                # x as matmul LHS: (tm, tk) tile, walks K.
                pl.BlockSpec((tm, tk), lambda i, j, k: (i, k)),
                # W: (tk, tn) tile.
                pl.BlockSpec((tk, tn), lambda i, j, k: (k, j)),
                # b: (1, tn) row, constant across i and k (no re-DMA per k).
                pl.BlockSpec((1, tn), lambda i, j, k: (0, j)),
                # x again as the residual tile aligned with the output tile;
                # index is k-invariant so Pallas keeps it resident across K.
                pl.BlockSpec((tm, tn), lambda i, j, k: (i, j)),
            ],
            out_specs=pl.BlockSpec((tm, tn), lambda i, j, k: (i, j)),
            scratch_shapes=[pltpu.VMEM((tm, tn), jnp.float32)],
        ),
        compiler_params=pltpu.CompilerParams(
            dimension_semantics=("parallel", "parallel", "arbitrary"),
        ),
        cost_estimate=cost,
    )(x, w, b, x)


if __name__ == "__main__":
    key = jax.random.PRNGKey(0)
    kx, kw, kb = jax.random.split(key, 3)

    # Small shapes consistent with the module's forward: (batch*seq, hidden).
    batch, seq, hidden = 2, 8, 32
    x = jax.random.normal(kx, (batch * seq, hidden), dtype=jnp.float32)
    w = jax.random.normal(kw, (hidden, hidden), dtype=jnp.float32) * 0.02
    b = jax.random.normal(kb, (1, hidden), dtype=jnp.float32) * 0.02

    out = residual(x, w, b)
    out = jax.block_until_ready(out)

    # Reference: fn(x) + x in plain JAX.
    ref = x @ w + b + x
    assert out.shape == (batch * seq, hidden)
    assert jnp.allclose(out, ref, atol=1e-5, rtol=1e-5)

    print("KERNEL_OK")
</pallas_src>

<mosaic_0001>
module attributes {stable_mosaic.version = 11 : i64} {
  func.func @residual_linear_kernel(%arg0: i32, %arg1: i32, %arg2: i32, %arg3: memref<16x32xf32, #tpu.memory_space<vmem>>, %arg4: memref<32x32xf32, #tpu.memory_space<vmem>>, %arg5: memref<1x32xf32, #tpu.memory_space<vmem>>, %arg6: memref<16x32xf32, #tpu.memory_space<vmem>>, %arg7: memref<16x32xf32, #tpu.memory_space<vmem>>, %arg8: memref<16x32xf32, #tpu.memory_space<vmem>>) attributes {dimension_semantics = [#tpu.dimension_semantics<parallel>, #tpu.dimension_semantics<parallel>, #tpu.dimension_semantics<arbitrary>], iteration_bounds = array<i64: 1, 1, 1>, scalar_prefetch = 0 : i64, scratch_operands = 1 : i64, tpu.core_type = #tpu.core_type<tc>, window_params = [{transform_indices = @transform_0, window_bounds = array<i64: 16, 32>}, {transform_indices = @transform_1, window_bounds = array<i64: 32, 32>}, {transform_indices = @transform_2, window_bounds = array<i64: 1, 32>}, {transform_indices = @transform_3, window_bounds = array<i64: 16, 32>}, {transform_indices = @transform_4, window_bounds = array<i64: 16, 32>}]} {
    %c0_i32 = arith.constant 0 : i32
    %0 = arith.cmpi eq, %arg2, %c0_i32 : i32
    %1 = arith.extui %0 : i1 to i32
    %c0_i32_0 = arith.constant 0 : i32
    %2 = arith.cmpi ne, %1, %c0_i32_0 : i32
    scf.if %2 {
      %cst_10 = arith.constant 0.000000e+00 : f32
      %12 = vector.broadcast %cst_10 : f32 to vector<16x32xf32>
      %c0_11 = arith.constant 0 : index
      %c0_12 = arith.constant 0 : index
      %13 = vector.load %arg8[%c0_11, %c0_12] : memref<16x32xf32, #tpu.memory_space<vmem>>, vector<16x32xf32>
      tpu.vector_store %arg8[%c0_11, %c0_12], %12 {strides = array<i32>} : memref<16x32xf32, #tpu.memory_space<vmem>>, vector<16x32xf32>,
    } else {
    }
    %c0 = arith.constant 0 : index
    %c0_1 = arith.constant 0 : index
    %3 = vector.load %arg8[%c0, %c0_1] : memref<16x32xf32, #tpu.memory_space<vmem>>, vector<16x32xf32>
    %c0_2 = arith.constant 0 : index
    %c0_3 = arith.constant 0 : index
    %4 = vector.load %arg3[%c0_2, %c0_3] : memref<16x32xf32, #tpu.memory_space<vmem>>, vector<16x32xf32>
    %c0_4 = arith.constant 0 : index
    %c0_5 = arith.constant 0 : index
    %5 = vector.load %arg4[%c0_4, %c0_5] : memref<32x32xf32, #tpu.memory_space<vmem>>, vector<32x32xf32>
    %cst = arith.constant dense<0.000000e+00> : vector<16x32xf32>
    %6 = tpu.matmul %4, %5, %cst {dimension_numbers = #tpu.dot_dimension_numbers<[1], [0], [0], [1], [0, 0, 1, 1], [], []>} : vector<16x32xf32>, vector<32x32xf32>, vector<16x32xf32> -> vector<16x32xf32>
    %7 = arith.addf %3, %6 : vector<16x32xf32>
    %c0_6 = arith.constant 0 : index
    %c0_7 = arith.constant 0 : index
    %8 = vector.load %arg8[%c0_6, %c0_7] : memref<16x32xf32, #tpu.memory_space<vmem>>, vector<16x32xf32>
    tpu.vector_store %arg8[%c0_6, %c0_7], %7 {strides = array<i32>} : memref<16x32xf32, #tpu.memory_space<vmem>>, vector<16x32xf32>,
    %c0_i32_8 = arith.constant 0 : i32
    %9 = arith.cmpi eq, %arg2, %c0_i32_8 : i32
    %10 = arith.extui %9 : i1 to i32
    %c0_i32_9 = arith.constant 0 : i32
    %11 = arith.cmpi ne, %10, %c0_i32_9 : i32
    scf.if %11 {
      %c0_10 = arith.constant 0 : index
      %c0_11 = arith.constant 0 : index
      %12 = vector.load %arg8[%c0_10, %c0_11] : memref<16x32xf32, #tpu.memory_space<vmem>>, vector<16x32xf32>
      %c0_12 = arith.constant 0 : index
      %c0_13 = arith.constant 0 : index
      %13 = vector.load %arg5[%c0_12, %c0_13] : memref<1x32xf32, #tpu.memory_space<vmem>>, vector<1x32xf32>
      %14 = vector.broadcast %13 : vector<1x32xf32> to vector<16x32xf32>
      %15 = arith.addf %12, %14 : vector<16x32xf32>
      %c0_14 = arith.constant 0 : index
      %c0_15 = arith.constant 0 : index
      %16 = vector.load %arg6[%c0_14, %c0_15] : memref<16x32xf32, #tpu.memory_space<vmem>>, vector<16x32xf32>
      %17 = arith.addf %15, %16 : vector<16x32xf32>
      %c0_16 = arith.constant 0 : index
      %c0_17 = arith.constant 0 : index
      %18 = vector.load %arg7[%c0_16, %c0_17] : memref<16x32xf32, #tpu.memory_space<vmem>>, vector<16x32xf32>
      tpu.vector_store %arg7[%c0_16, %c0_17], %17 {strides = array<i32>} : memref<16x32xf32, #tpu.memory_space<vmem>>, vector<16x32xf32>,
    } else {
    }
    return
  }
  func.func @transform_0(%arg0: i32, %arg1: i32, %arg2: i32) -> (i32, i32) {
    %c0_i32 = arith.constant 0 : i32
    return %arg0, %arg2 : i32, i32
  }
  func.func @transform_1(%arg0: i32, %arg1: i32, %arg2: i32) -> (i32, i32) {
    %c0_i32 = arith.constant 0 : i32
    return %arg2, %arg1 : i32, i32
  }
  func.func @transform_2(%arg0: i32, %arg1: i32, %arg2: i32) -> (i32, i32) {
    %c0_i32 = arith.constant 0 : i32
    %c0_i32_0 = arith.constant 0 : i32
    return %c0_i32, %arg1 : i32, i32
  }
  func.func @transform_3(%arg0: i32, %arg1: i32, %arg2: i32) -> (i32, i32) {
    %c0_i32 = arith.constant 0 : i32
    return %arg0, %arg1 : i32, i32
  }
  func.func @transform_4(%arg0: i32, %arg1: i32, %arg2: i32) -> (i32, i32) {
    %c0_i32 = arith.constant 0 : i32
    return %arg0, %arg1 : i32, i32
  }
}

</mosaic_0001>

<llo_original>
// kernel: tpu_custom_call.1
$region0: #{tpu_custom_call.1}
  #allocation0 [shape = 'u32[]', space=smem, size = 0x4, offset = 0x4, fixed_abs, tag = 'smem constant byte address 0x4 - core index']
  #allocation1 [shape = 'u32[72,128]{1,0:T(1,128)}', space=vmem, size = 0x9000, scoped, tag = 'internal scratch']
  #allocation2 [shape = 'f32[16,32]{1,0:T(8,128)}', space=vmem, size = 0x2000, scoped, tag = 'scratch operand']
  %s0 = inlined_call_operand.hbm [shape: f32[16,32], index: 0, kind: input, shape index: {}]
  %s1 = inlined_call_operand.hbm [shape: f32[32,32], index: 1, kind: input, shape index: {}]
  %s2 = inlined_call_operand.vmem [shape: f32[1,32], index: 2, kind: input, shape index: {}]
  %s3 = inlined_call_operand.hbm [shape: f32[16,32], index: 3, kind: input, shape index: {}]
  %s4 = inlined_call_operand.hbm [shape: f32[16,32], index: 4, kind: output, shape index: {}]
  %s5 = sld [smem:[#allocation0]]
  $region46: #{tpu_custom_call.1} parent=0
    _
  %s7 = ssub.s32 1, %s5
  %s8 = scalar_select 0, %s7, %s5
  $region1: #{tpu_custom_call.1} parent=0
    #allocation3 [shape = 'u8[8192]{0}', space=vmem, size = 0x2000, scoped, tag = 'input window, operand 0, single buffered']
    #allocation4 [shape = 's32[1]{0}', space=sflag, size = 0x4, scoped, tag = 'scoped memory for tpu_custom_call.1']
    #allocation5 [shape = 's32[1]{0}', space=sflag, size = 0x4, scoped, tag = 'scoped memory for tpu_custom_call.1']
    #allocation6 [shape = 'u8[16384]{0}', space=vmem, size = 0x4000, scoped, tag = 'input window, operand 1, single buffered']
    #allocation7 [shape = 's32[1]{0}', space=sflag, size = 0x4, scoped, tag = 'scoped memory for tpu_custom_call.1']
    #allocation8 [shape = 'u8[8192]{0}', space=vmem, size = 0x2000, scoped, tag = 'input window, operand 3, single buffered']
    #allocation9 [shape = 'u8[8192]{0}', space=vmem, size = 0x2000, scoped, tag = 'output window, operand 0, single buffered']
    %9 = vsyncpa [#allocation4], 0
    %10 = vsyncpa [#allocation7], 0
    %11 = vsyncpa [#allocation5], 0
    // Predicated region
    $region2: #{tpu_custom_call.1} parent=1 // pred_check
      _
    $region3: #{tpu_custom_call.1} parent=1 // pred_check_branch
      %13 = sbr.rel (0) target = $region5
    $region4: #{tpu_custom_call.1} parent=1 // pred_region
      %15 = vsyncadd [#allocation4], 0
      %s16 = sshll.u32 %s0, 4
      %s17 = int_to_ptr.hbm [resolvable:$true] %s16
      %s18 = sshll.u32 [#allocation3], 4
      %s19 = int_to_ptr.vmem [resolvable:$true] %s18
      %24 = dma.hbm_to_vmem [thread:$0]  %s17, 256, %s19, [#allocation4], 128, 128, 8
    $region5: #{tpu_custom_call.1} parent=1 // pred_fallthru
      _
    // Predicated region
    $region6: #{tpu_custom_call.1} parent=1 // pred_check
      _
    $region7: #{tpu_custom_call.1} parent=1 // pred_check_branch
      %26 = sbr.rel (0) target = $region9
    $region8: #{tpu_custom_call.1} parent=1 // pred_region
      %28 = vsyncadd [#allocation7], 0
      %s29 = sshll.u32 %s1, 4
      %s30 = int_to_ptr.hbm [resolvable:$true] %s29
      %s31 = sshll.u32 [#allocation6], 4
      %s32 = int_to_ptr.vmem [resolvable:$true] %s31
      %37 = dma.hbm_to_vmem [thread:$0]  %s30, 512, %s32, [#allocation7], 128, 128, 8
    $region9: #{tpu_custom_call.1} parent=1 // pred_fallthru
      _
    // Predicated region
    $region10: #{tpu_custom_call.1} parent=1 // pred_check
      _
    $region11: #{tpu_custom_call.1} parent=1 // pred_check_branch
      %39 = sbr.rel (0) target = $region13
    $region12: #{tpu_custom_call.1} parent=1 // pred_region
      _
    $region13: #{tpu_custom_call.1} parent=1 // pred_fallthru
      _
    // Predicated region
    $region14: #{tpu_custom_call.1} parent=1 // pred_check
      _
    $region15: #{tpu_custom_call.1} parent=1 // pred_check_branch
      %41 = sbr.rel (0) target = $region17
    $region16: #{tpu_custom_call.1} parent=1 // pred_region
      %43 = vsyncadd [#allocation7], 0
      %s44 = sshll.u32 %s3, 4
      %s45 = int_to_ptr.hbm [resolvable:$true] %s44
      %s46 = sshll.u32 [#allocation8], 4
      %s47 = int_to_ptr.vmem [resolvable:$true] %s46
      %52 = dma.hbm_to_vmem [thread:$0]  %s45, 256, %s47, [#allocation7], 128, 128, 8
    $region17: #{tpu_custom_call.1} parent=1 // pred_fallthru
      _
    // Predicated region
    $region18: #{tpu_custom_call.1} parent=1 // pred_check
      _
    $region19: #{tpu_custom_call.1} parent=1 // pred_check_branch
      %54 = sbr.rel (0) target = $region21
    $region20: #{tpu_custom_call.1} parent=1 // pred_region
      %56 = dma.done [#allocation4], 256
    $region21: #{tpu_custom_call.1} parent=1 // pred_fallthru
      _
    // Predicated region
    $region22: #{tpu_custom_call.1} parent=1 // pred_check
      _
    $region23: #{tpu_custom_call.1} parent=1 // pred_check_branch
      %58 = sbr.rel (0) target = $region25
    $region24: #{tpu_custom_call.1} parent=1 // pred_region
      %60 = dma.done [#allocation7], 512
    $region25: #{tpu_custom_call.1} parent=1 // pred_fallthru
      _
    // Predicated region
    $region26: #{tpu_custom_call.1} parent=1 // pred_check
      _
    $region27: #{tpu_custom_call.1} parent=1 // pred_check_branch
      %62 = sbr.rel (0) target = $region29
    $region28: #{tpu_custom_call.1} parent=1 // pred_region
      %64 = dma.done [#allocation7], 256
    $region29: #{tpu_custom_call.1} parent=1 // pred_fallthru
      _
    %p65 = scmp.eq.s32.totalorder 0, 0
    // Predicated region
    $region30: #{tpu_custom_call.1} parent=1 // pred_check
      %p66 = pneg %p65
    $region31: #{tpu_custom_call.1} parent=1 // pred_check_branch
      %68 = sbr.rel (%p66) target = $region33
    $region32: #{tpu_custom_call.1} parent=1 // pred_region
      %vm69 = vcmask 261120
      %70 = vst.msk [vmem:[#allocation2] sm:$0xff] %vm69, 0.0
      %71 = vst.msk [vmem:[#allocation2 + $0x8] sm:$0xff] %vm69, 0.0
    $region33: #{tpu_custom_call.1} parent=1 // pred_fallthru
      _
    %v72 = vld [vmem:[#allocation2] sm:$0xff]
    %v73 = vld [vmem:[#allocation2 + $0x8] sm:$0xff]
    %v74 = vld [vmem:[#allocation3] sm:$0xff]
    %v75 = vld [vmem:[#allocation3 + $0x8] sm:$0xff]
    %v76 = vld [vmem:[#allocation6] sm:$0xff]
    %v77 = vld [vmem:[#allocation6 + $0x8] sm:$0xff]
    %v78 = vld [vmem:[#allocation6 + $0x10] sm:$0xff]
    %v79 = vld [vmem:[#allocation6 + $0x18] sm:$0xff]
    %vm80 = vcmask 261120
    %v82 = vsel %vm80, %v74, 0
    %v85 = vsel %vm80, %v75, 0
    %87 = vmatpush.msra.mxu0 0.0
    %88 = vmatpush.msra.mxu0 0.0
    %89 = vmatpush.msra.mxu0 0.0
    %90 = vmatpush.msra.mxu0 0.0
    %91 = vmatpush.msra.mxu0 0.0
    %92 = vmatpush.msra.mxu0 0.0
    %93 = vmatpush.msra.mxu0 0.0
    %94 = vmatpush.msra.mxu0 0.0
    %95 = vmatpush.msra.mxu0 0.0
    %96 = vmatpush.msra.mxu0 0.0
    %97 = vmatpush.msra.mxu0 0.0
    %98 = vmatpush.msra.mxu0 0.0
    %99 = vmatpush.msra.mxu0 %v79
    %100 = vmatpush.msra.mxu0 %v78
    %101 = vmatpush.msra.mxu0 %v77
    %102 = vmatpush.msra.mxu0 %v76
    %103 = vmatmul.f32.gmra.mxu0 %v82
    %v104 = vpop.f32.mrf.mxu0
    %v105 = vadd.f32 0.0, %v104
    %106 = vmatmul.f32.gmra.mxu0 %v85
    %v107 = vpop.f32.mrf.mxu0
    %v108 = vadd.f32 0.0, %v107
    %109 = vdwg.mxu0
    %v110 = vadd.f32 %v72, %v105
    %v111 = vadd.f32 %v73, %v108
    %112 = vst.msk [vmem:[#allocation2] sm:$0xff] %vm80, %v110
    %113 = vst.msk [vmem:[#allocation2 + $0x8] sm:$0xff] %vm80, %v111
    // Predicated region
    $region34: #{tpu_custom_call.1} parent=1 // pred_check
      %p114 = pneg %p65
    $region35: #{tpu_custom_call.1} parent=1 // pred_check_branch
      %116 = sbr.rel (%p114) target = $region37
    $region36: #{tpu_custom_call.1} parent=1 // pred_region
      %v117 = vld [vmem:[#allocation2] sm:$0xff]
      %v118 = vld [vmem:[#allocation2 + $0x8] sm:$0xff]
      %v119 = vld [vmem:[%s2] sm:$0x1]
      %v121 = vperm.slane %v119, 0
      %v123 = vadd.f32 %v117, %v121
      %v124 = vadd.f32 %v118, %v121
      %v125 = vld [vmem:[#allocation8] sm:$0xff]
      %v126 = vld [vmem:[#allocation8 + $0x8] sm:$0xff]
      %v127 = vadd.f32 %v123, %v125
      %v128 = vadd.f32 %v124, %v126
      %129 = vst.msk [vmem:[#allocation9] sm:$0xff] %vm80, %v127
      %130 = vst.msk [vmem:[#allocation9 + $0x8] sm:$0xff] %vm80, %v128
    $region37: #{tpu_custom_call.1} parent=1 // pred_fallthru
      _
    // Predicated region
    $region38: #{tpu_custom_call.1} parent=1 // pred_check
      _
    $region39: #{tpu_custom_call.1} parent=1 // pred_check_branch
      %132 = sbr.rel (0) target = $region41
    $region40: #{tpu_custom_call.1} parent=1 // pred_region
      %134 = vsyncadd [#allocation5], 0
      %s135 = sshll.u32 [#allocation9], 4
      %s136 = int_to_ptr.vmem [resolvable:$true] %s135
      %s137 = sshll.u32 %s4, 4
      %s138 = int_to_ptr.hbm [resolvable:$true] %s137
      %143 = dma.vmem_to_hbm [thread:$0]  %s136, 256, %s138, [#allocation5], 128, 128, 8
    $region41: #{tpu_custom_call.1} parent=1 // pred_fallthru
      _
    // Predicated region
    $region42: #{tpu_custom_call.1} parent=1 // pred_check
      _
    $region43: #{tpu_custom_call.1} parent=1 // pred_check_branch
      %145 = sbr.rel (0) target = $region45
    $region44: #{tpu_custom_call.1} parent=1 // pred_region
      %147 = dma.done [#allocation5], 256
    $region45: #{tpu_custom_call.1} parent=1 // pred_fallthru
      _
    %148 = vsyncpa [#allocation4], 1
    %149 = vsyncpa [#allocation7], 1
    %150 = vsyncpa [#allocation5], 1

</llo_original>
